<compile_context>
chip_gen: v5e
topology: v5e:2x2
jax: 0.10.0
libtpu: 0.0.40
codegen_flags: <defaults>
</compile_context>

<pallas_src>
import numpy as np
import jax
import jax.numpy as jnp
from jax.experimental import pallas as pl
from jax.experimental.pallas import tpu as pltpu


# ----------------------------- Pallas kernel ------------------------------ #

def make_kernel(bt, cout):
    """bt = images per grid step (static), cout = output channels (static)."""

    def kernel(xl_ref, xg_ref, wl_ref, bl_ref, wcat_ref, bcat_ref, kup_ref,
               out_ref):
        # Hoist loop-invariant loads (weights / biases / interp matrix) once.
        wl = wl_ref[...]        # (Cout, Cin)    bf16
        bl = bl_ref[...]        # (Cout, 1)      f32
        wcat = wcat_ref[...]    # (2*Cout, Cin)  bf16
        bcat = bcat_ref[...]    # (2*Cout, 1)    f32
        kup = kup_ref[...]      # (Hg*Wg, H*W)   f32   dense kron(Rh, Rw)^T

        for bb in range(bt):    # static unroll; per-image live state is a few KiB
            # in-kernel bf16 cast (inputs arrive as f32 straight from HBM)
            xl = xl_ref[bb].astype(jnp.bfloat16)   # (Cin, H*W)   lane-dense
            xg = xg_ref[bb].astype(jnp.bfloat16)   # (Cin, Hg*Wg)

            # local_embedding + bn1 : (Cout, H*W), single lane-dense MXU matmul
            local = jnp.dot(wl, xl, preferred_element_type=jnp.float32) + bl

            # fused global branch (embedding | act) + bn2/bn3 : (2*Cout, Hg*Wg)
            g = jnp.dot(wcat, xg, preferred_element_type=jnp.float32) + bcat
            g_feat = g[:cout]                        # rows are sublane-aligned
            # h_sigmoid affine folded into weights -> plain clip(x, 0, 1)
            g_act = jnp.clip(g[cout:], 0.0, 1.0)

            # dense bilinear upsample (align_corners=False): lane-dense matmuls
            gfeat_up = jnp.dot(g_feat, kup,
                               preferred_element_type=jnp.float32)   # (Cout, H*W)
            sig_up = jnp.dot(g_act, kup,
                             preferred_element_type=jnp.float32)     # (Cout, H*W)

            # gate + ONE lane-dense store of the whole (Cout, H*W) tile
            out_ref[bb] = (local * sig_up + gfeat_up).astype(out_ref.dtype)

    return kernel


def scale_aware_gate(x_l, x_g, w_l, b_l, w_g, b_g, w_a, b_a, batch_tile=None):
    """x_l: (B, Cin, H, W), x_g: (B, Cin, Hg, Wg)  (NCHW, like PyTorch).
    w_*: (Cin, Cout) BN-folded 1x1 conv weights, b_*: (Cout,) folded bias.
    Returns (B, Cout, H, W)."""
    B, Cin, H, W = x_l.shape
    _, _, Hg, Wg = x_g.shape
    Cout = w_l.shape[1]
    HW, HgWg = H * W, Hg * Wg

    bt = B if batch_tile is None else batch_tile
    assert B % bt == 0, "batch_tile must divide B"

    # channel-first, spatial-last: pure reshapes of NCHW (no transposes, no casts —
    # the bf16 cast happens in-kernel after the DMA).
    xl = x_l.reshape(B, Cin, HW)
    xg = x_g.reshape(B, Cin, HgWg)

    # fold h_sigmoid's (x+3)/6 into the act-branch weights.
    w_a6 = w_a / 6.0
    b_a6 = (b_a + 3.0) / 6.0

    wl_t = w_l.T.astype(jnp.bfloat16)                                       # (Cout, Cin)
    wcat_t = jnp.concatenate([w_g.T, w_a6.T], axis=0).astype(jnp.bfloat16)  # (2Cout, Cin)
    bl_c = b_l.reshape(Cout, 1).astype(jnp.float32)
    bcat_c = jnp.concatenate([b_g, b_a6]).reshape(2 * Cout, 1).astype(jnp.float32)

    # dense bilinear interpolation operator (align_corners=False), built on host:
    # up_flat = g_flat @ kron(Rh, Rw)^T   (HgWg x HW; 64 KiB at demo sizes).
    rh = interp_matrix(H, Hg)            # (H, Hg)
    rw = interp_matrix(W, Wg)            # (W, Wg)
    kup = jnp.asarray(np.kron(rh, rw).T, dtype=jnp.float32)                 # (HgWg, HW)

    kernel = make_kernel(bt, Cout)
    fixed = lambda b: (0, 0)

    out = pl.pallas_call(
        kernel,
        out_shape=jax.ShapeDtypeStruct((B, Cout, HW), jnp.float32),
        grid_spec=pltpu.PrefetchScalarGridSpec(
            num_scalar_prefetch=0,
            grid=(B // bt,),
            in_specs=[
                pl.BlockSpec((bt, Cin, HW), lambda b: (b, 0, 0)),
                pl.BlockSpec((bt, Cin, HgWg), lambda b: (b, 0, 0)),
                pl.BlockSpec((Cout, Cin), fixed),
                pl.BlockSpec((Cout, 1), fixed),
                pl.BlockSpec((2 * Cout, Cin), fixed),
                pl.BlockSpec((2 * Cout, 1), fixed),
                pl.BlockSpec((HgWg, HW), fixed),
            ],
            out_specs=pl.BlockSpec((bt, Cout, HW), lambda b: (b, 0, 0)),
        ),
        compiler_params=pltpu.CompilerParams(
            dimension_semantics=("parallel",)),
    )(xl, xg, wl_t, bl_c, wcat_t, bcat_c, kup)

    # (B, Cout, H*W) is already NCHW up to a free reshape.
    return out.reshape(B, Cout, H, W)


# ------------------------- interpolation / parameters ---------------------- #

def interp_matrix(out_size, in_size):
    """Row-stochastic 1D bilinear interp matrix, PyTorch align_corners=False."""
    d = np.arange(out_size, dtype=np.float64)
    src = np.maximum((d + 0.5) * (in_size / out_size) - 0.5, 0.0)
    i0 = np.clip(np.floor(src).astype(np.int64), 0, in_size - 1)
    i1 = np.minimum(i0 + 1, in_size - 1)
    lam = src - i0
    R = np.zeros((out_size, in_size), dtype=np.float32)
    R[np.arange(out_size), i0] += (1.0 - lam)
    R[np.arange(out_size), i1] += lam
    return R


def fold_bn(w_conv, b_conv, gamma, beta, mean, var, eps=1e-5):
    """Fold eval-mode BatchNorm into a 1x1 conv.
    w_conv: (Cout, Cin), b_conv: (Cout,). Returns matmul-form (Cin, Cout), (Cout,)."""
    scale = gamma / jnp.sqrt(var + eps)
    w = (w_conv * scale[:, None]).T          # (Cin, Cout)
    b = (b_conv - mean) * scale + beta
    return w.astype(jnp.float32), b.astype(jnp.float32)


def make_params(key, cin, cout):
    ks = jax.random.split(key, 18)
    def branch(k0, k1, k2, k3, k4, k5):
        w = jax.random.normal(k0, (cout, cin), jnp.float32) * 0.1
        b = jax.random.normal(k1, (cout,), jnp.float32) * 0.1
        gamma = 1.0 + 0.1 * jax.random.normal(k2, (cout,), jnp.float32)
        beta = 0.1 * jax.random.normal(k3, (cout,), jnp.float32)
        mean = 0.1 * jax.random.normal(k4, (cout,), jnp.float32)
        var = jnp.abs(jax.random.normal(k5, (cout,), jnp.float32)) + 0.5
        return fold_bn(w, b, gamma, beta, mean, var)
    wl, bl = branch(*ks[0:6])
    wg, bg = branch(*ks[6:12])
    wa, ba = branch(*ks[12:18])
    return wl, bl, wg, bg, wa, ba


# ------------------------------ pure-JAX reference ------------------------- #

def bilinear_upsample_ref(x, H, W):
    """x: (B, C, Hg, Wg). Gather-based bilinear, align_corners=False."""
    _, _, Hg, Wg = x.shape
    def src(out_size, in_size):
        d = jnp.arange(out_size, dtype=jnp.float32)
        s = jnp.maximum((d + 0.5) * (in_size / out_size) - 0.5, 0.0)
        i0 = jnp.clip(jnp.floor(s).astype(jnp.int32), 0, in_size - 1)
        i1 = jnp.minimum(i0 + 1, in_size - 1)
        return i0, i1, s - i0.astype(jnp.float32)
    h0, h1, lh = src(H, Hg)
    w0, w1, lw = src(W, Wg)
    x00 = x[:, :, h0][:, :, :, w0]
    x01 = x[:, :, h0][:, :, :, w1]
    x10 = x[:, :, h1][:, :, :, w0]
    x11 = x[:, :, h1][:, :, :, w1]
    lh = lh[None, None, :, None]
    lw = lw[None, None, None, :]
    return (x00 * (1 - lh) * (1 - lw) + x01 * (1 - lh) * lw
            + x10 * lh * (1 - lw) + x11 * lh * lw)


def ref_forward(x_l, x_g, wl, bl, wg, bg, wa, ba):
    H, W = x_l.shape[2], x_l.shape[3]
    conv = lambda x, w, b: (jnp.einsum('bchw,co->bohw', x, w)
                            + b[None, :, None, None])
    local = conv(x_l, wl, bl)
    gfeat = bilinear_upsample_ref(conv(x_g, wg, bg), H, W)
    gact = conv(x_g, wa, ba)
    sig = bilinear_upsample_ref(jnp.clip(gact + 3.0, 0.0, 6.0) / 6.0, H, W)
    return local * sig + gfeat


# ---------------------------------- main ----------------------------------- #

if __name__ == "__main__":
    B, Cin, Cout = 2, 4, 8
    H, W = 16, 16          # local (high-res) spatial size
    Hg, Wg = 8, 8          # global (low-res) spatial size

    key = jax.random.PRNGKey(0)
    k_xl, k_xg, k_p = jax.random.split(key, 3)
    x_l = jax.random.normal(k_xl, (B, Cin, H, W), jnp.float32)
    x_g = jax.random.normal(k_xg, (B, Cin, Hg, Wg), jnp.float32)

    wl, bl, wg, bg, wa, ba = make_params(k_p, Cin, Cout)

    out = scale_aware_gate(x_l, x_g, wl, bl, wg, bg, wa, ba)
    out = jax.block_until_ready(out)

    ref = ref_forward(x_l, x_g, wl, bl, wg, bg, wa, ba)
    # conv operands are fed to the MXU in bf16 -> loosened tolerance vs f32 reference
    np.testing.assert_allclose(np.asarray(out), np.asarray(ref),
                               atol=5e-2, rtol=5e-2)
    print("KERNEL_OK")
</pallas_src>

<mosaic_0001>
module attributes {stable_mosaic.version = 11 : i64} {
  func.func @kernel(%arg0: i32, %arg1: memref<2x4x256xf32, #tpu.memory_space<vmem>>, %arg2: memref<2x4x64xf32, #tpu.memory_space<vmem>>, %arg3: memref<8x4xbf16, #tpu.memory_space<vmem>>, %arg4: memref<8x1xf32, #tpu.memory_space<vmem>>, %arg5: memref<16x4xbf16, #tpu.memory_space<vmem>>, %arg6: memref<16x1xf32, #tpu.memory_space<vmem>>, %arg7: memref<64x256xf32, #tpu.memory_space<vmem>>, %arg8: memref<2x8x256xf32, #tpu.memory_space<vmem>>) attributes {dimension_semantics = [#tpu.dimension_semantics<parallel>], iteration_bounds = array<i64: 1>, scalar_prefetch = 0 : i64, scratch_operands = 0 : i64, tpu.core_type = #tpu.core_type<tc>, window_params = [{transform_indices = @transform_0, window_bounds = array<i64: 2, 4, 256>}, {transform_indices = @transform_1, window_bounds = array<i64: 2, 4, 64>}, {pipeline_mode = #tpu.pipeline_mode<synchronous>, transform_indices = @transform_2, window_bounds = array<i64: 8, 4>}, {pipeline_mode = #tpu.pipeline_mode<synchronous>, transform_indices = @transform_3, window_bounds = array<i64: 8, 1>}, {pipeline_mode = #tpu.pipeline_mode<synchronous>, transform_indices = @transform_4, window_bounds = array<i64: 16, 4>}, {pipeline_mode = #tpu.pipeline_mode<synchronous>, transform_indices = @transform_5, window_bounds = array<i64: 16, 1>}, {pipeline_mode = #tpu.pipeline_mode<synchronous>, transform_indices = @transform_6, window_bounds = array<i64: 64, 256>}, {transform_indices = @transform_7, window_bounds = array<i64: 2, 8, 256>}]} {
    %c0 = arith.constant 0 : index
    %c0_0 = arith.constant 0 : index
    %0 = vector.load %arg3[%c0, %c0_0] : memref<8x4xbf16, #tpu.memory_space<vmem>>, vector<8x4xbf16>
    %c0_1 = arith.constant 0 : index
    %c0_2 = arith.constant 0 : index
    %1 = vector.load %arg4[%c0_1, %c0_2] : memref<8x1xf32, #tpu.memory_space<vmem>>, vector<8x1xf32>
    %c0_3 = arith.constant 0 : index
    %c0_4 = arith.constant 0 : index
    %2 = vector.load %arg5[%c0_3, %c0_4] : memref<16x4xbf16, #tpu.memory_space<vmem>>, vector<16x4xbf16>
    %c0_5 = arith.constant 0 : index
    %c0_6 = arith.constant 0 : index
    %3 = vector.load %arg6[%c0_5, %c0_6] : memref<16x1xf32, #tpu.memory_space<vmem>>, vector<16x1xf32>
    %c0_7 = arith.constant 0 : index
    %c0_8 = arith.constant 0 : index
    %4 = vector.load %arg7[%c0_7, %c0_8] : memref<64x256xf32, #tpu.memory_space<vmem>>, vector<64x256xf32>
    %c0_9 = arith.constant 0 : index
    %c0_10 = arith.constant 0 : index
    %c0_11 = arith.constant 0 : index
    %5 = vector.load %arg1[%c0_9, %c0_10, %c0_11] : memref<2x4x256xf32, #tpu.memory_space<vmem>>, vector<1x4x256xf32>
    %6 = vector.shape_cast %5 : vector<1x4x256xf32> to vector<4x256xf32>
    %7 = arith.truncf %6 : vector<4x256xf32> to vector<4x256xbf16>
    %c0_12 = arith.constant 0 : index
    %c0_13 = arith.constant 0 : index
    %c0_14 = arith.constant 0 : index
    %8 = vector.load %arg2[%c0_12, %c0_13, %c0_14] : memref<2x4x64xf32, #tpu.memory_space<vmem>>, vector<1x4x64xf32>
    %9 = vector.shape_cast %8 : vector<1x4x64xf32> to vector<4x64xf32>
    %10 = arith.truncf %9 : vector<4x64xf32> to vector<4x64xbf16>
    %cst = arith.constant dense<0.000000e+00> : vector<8x256xf32>
    %11 = tpu.matmul %0, %7, %cst {dimension_numbers = #tpu.dot_dimension_numbers<[1], [0], [0], [1], [0, 0, 1, 1], [], []>} : vector<8x4xbf16>, vector<4x256xbf16>, vector<8x256xf32> -> vector<8x256xf32>
    %12 = vector.broadcast %1 : vector<8x1xf32> to vector<8x256xf32>
    %13 = arith.addf %11, %12 : vector<8x256xf32>
    %cst_15 = arith.constant dense<0.000000e+00> : vector<16x64xf32>
    %14 = tpu.matmul %2, %10, %cst_15 {dimension_numbers = #tpu.dot_dimension_numbers<[1], [0], [0], [1], [0, 0, 1, 1], [], []>} : vector<16x4xbf16>, vector<4x64xbf16>, vector<16x64xf32> -> vector<16x64xf32>
    %15 = vector.broadcast %3 : vector<16x1xf32> to vector<16x64xf32>
    %16 = arith.addf %14, %15 : vector<16x64xf32>
    %17 = vector.extract_strided_slice %16 {offsets = [0, 0], sizes = [8, 64], strides = [1, 1]} : vector<16x64xf32> to vector<8x64xf32>
    %18 = vector.extract_strided_slice %16 {offsets = [8, 0], sizes = [8, 64], strides = [1, 1]} : vector<16x64xf32> to vector<8x64xf32>
    %cst_16 = arith.constant 0.000000e+00 : f32
    %cst_17 = arith.constant 1.000000e+00 : f32
    %19 = vector.broadcast %cst_16 : f32 to vector<8x64xf32>
    %20 = arith.maximumf %19, %18 : vector<8x64xf32>
    %21 = vector.broadcast %cst_17 : f32 to vector<8x64xf32>
    %22 = arith.minimumf %21, %20 : vector<8x64xf32>
    %cst_18 = arith.constant dense<0.000000e+00> : vector<8x256xf32>
    %23 = tpu.matmul %17, %4, %cst_18 {dimension_numbers = #tpu.dot_dimension_numbers<[1], [0], [0], [1], [0, 0, 1, 1], [], []>} : vector<8x64xf32>, vector<64x256xf32>, vector<8x256xf32> -> vector<8x256xf32>
    %cst_19 = arith.constant dense<0.000000e+00> : vector<8x256xf32>
    %24 = tpu.matmul %22, %4, %cst_19 {dimension_numbers = #tpu.dot_dimension_numbers<[1], [0], [0], [1], [0, 0, 1, 1], [], []>} : vector<8x64xf32>, vector<64x256xf32>, vector<8x256xf32> -> vector<8x256xf32>
    %25 = arith.mulf %13, %24 : vector<8x256xf32>
    %26 = arith.addf %25, %23 : vector<8x256xf32>
    %c0_20 = arith.constant 0 : index
    %c0_21 = arith.constant 0 : index
    %c0_22 = arith.constant 0 : index
    %27 = vector.load %arg8[%c0_20, %c0_21, %c0_22] : memref<2x8x256xf32, #tpu.memory_space<vmem>>, vector<1x8x256xf32>
    %28 = vector.shape_cast %27 : vector<1x8x256xf32> to vector<8x256xf32>
    %29 = vector.shape_cast %26 : vector<8x256xf32> to vector<1x8x256xf32>
    tpu.vector_store %arg8[%c0_20, %c0_21, %c0_22], %29 {strides = array<i32>} : memref<2x8x256xf32, #tpu.memory_space<vmem>>, vector<1x8x256xf32>,
    %c1 = arith.constant 1 : index
    %c0_23 = arith.constant 0 : index
    %c0_24 = arith.constant 0 : index
    %30 = vector.load %arg1[%c1, %c0_23, %c0_24] : memref<2x4x256xf32, #tpu.memory_space<vmem>>, vector<1x4x256xf32>
    %31 = vector.shape_cast %30 : vector<1x4x256xf32> to vector<4x256xf32>
    %32 = arith.truncf %31 : vector<4x256xf32> to vector<4x256xbf16>
    %c1_25 = arith.constant 1 : index
    %c0_26 = arith.constant 0 : index
    %c0_27 = arith.constant 0 : index
    %33 = vector.load %arg2[%c1_25, %c0_26, %c0_27] : memref<2x4x64xf32, #tpu.memory_space<vmem>>, vector<1x4x64xf32>
    %34 = vector.shape_cast %33 : vector<1x4x64xf32> to vector<4x64xf32>
    %35 = arith.truncf %34 : vector<4x64xf32> to vector<4x64xbf16>
    %cst_28 = arith.constant dense<0.000000e+00> : vector<8x256xf32>
    %36 = tpu.matmul %0, %32, %cst_28 {dimension_numbers = #tpu.dot_dimension_numbers<[1], [0], [0], [1], [0, 0, 1, 1], [], []>} : vector<8x4xbf16>, vector<4x256xbf16>, vector<8x256xf32> -> vector<8x256xf32>
    %37 = vector.broadcast %1 : vector<8x1xf32> to vector<8x256xf32>
    %38 = arith.addf %36, %37 : vector<8x256xf32>
    %cst_29 = arith.constant dense<0.000000e+00> : vector<16x64xf32>
    %39 = tpu.matmul %2, %35, %cst_29 {dimension_numbers = #tpu.dot_dimension_numbers<[1], [0], [0], [1], [0, 0, 1, 1], [], []>} : vector<16x4xbf16>, vector<4x64xbf16>, vector<16x64xf32> -> vector<16x64xf32>
    %40 = vector.broadcast %3 : vector<16x1xf32> to vector<16x64xf32>
    %41 = arith.addf %39, %40 : vector<16x64xf32>
    %42 = vector.extract_strided_slice %41 {offsets = [0, 0], sizes = [8, 64], strides = [1, 1]} : vector<16x64xf32> to vector<8x64xf32>
    %43 = vector.extract_strided_slice %41 {offsets = [8, 0], sizes = [8, 64], strides = [1, 1]} : vector<16x64xf32> to vector<8x64xf32>
    %cst_30 = arith.constant 0.000000e+00 : f32
    %cst_31 = arith.constant 1.000000e+00 : f32
    %44 = vector.broadcast %cst_30 : f32 to vector<8x64xf32>
    %45 = arith.maximumf %44, %43 : vector<8x64xf32>
    %46 = vector.broadcast %cst_31 : f32 to vector<8x64xf32>
    %47 = arith.minimumf %46, %45 : vector<8x64xf32>
    %cst_32 = arith.constant dense<0.000000e+00> : vector<8x256xf32>
    %48 = tpu.matmul %42, %4, %cst_32 {dimension_numbers = #tpu.dot_dimension_numbers<[1], [0], [0], [1], [0, 0, 1, 1], [], []>} : vector<8x64xf32>, vector<64x256xf32>, vector<8x256xf32> -> vector<8x256xf32>
    %cst_33 = arith.constant dense<0.000000e+00> : vector<8x256xf32>
    %49 = tpu.matmul %47, %4, %cst_33 {dimension_numbers = #tpu.dot_dimension_numbers<[1], [0], [0], [1], [0, 0, 1, 1], [], []>} : vector<8x64xf32>, vector<64x256xf32>, vector<8x256xf32> -> vector<8x256xf32>
    %50 = arith.mulf %38, %49 : vector<8x256xf32>
    %51 = arith.addf %50, %48 : vector<8x256xf32>
    %c1_34 = arith.constant 1 : index
    %c0_35 = arith.constant 0 : index
    %c0_36 = arith.constant 0 : index
    %52 = vector.load %arg8[%c1_34, %c0_35, %c0_36] : memref<2x8x256xf32, #tpu.memory_space<vmem>>, vector<1x8x256xf32>
    %53 = vector.shape_cast %52 : vector<1x8x256xf32> to vector<8x256xf32>
    %54 = vector.shape_cast %51 : vector<8x256xf32> to vector<1x8x256xf32>
    tpu.vector_store %arg8[%c1_34, %c0_35, %c0_36], %54 {strides = array<i32>} : memref<2x8x256xf32, #tpu.memory_space<vmem>>, vector<1x8x256xf32>,
    return
  }
  func.func @transform_0(%arg0: i32) -> (i32, i32, i32) {
    %c0_i32 = arith.constant 0 : i32
    %c0_i32_0 = arith.constant 0 : i32
    %c0_i32_1 = arith.constant 0 : i32
    return %arg0, %c0_i32, %c0_i32_0 : i32, i32, i32
  }
  func.func @transform_1(%arg0: i32) -> (i32, i32, i32) {
    %c0_i32 = arith.constant 0 : i32
    %c0_i32_0 = arith.constant 0 : i32
    %c0_i32_1 = arith.constant 0 : i32
    return %arg0, %c0_i32, %c0_i32_0 : i32, i32, i32
  }
  func.func @transform_2(%arg0: i32) -> (i32, i32) {
    %c0_i32 = arith.constant 0 : i32
    %c0_i32_0 = arith.constant 0 : i32
    %c0_i32_1 = arith.constant 0 : i32
    return %c0_i32, %c0_i32_0 : i32, i32
  }
  func.func @transform_3(%arg0: i32) -> (i32, i32) {
    %c0_i32 = arith.constant 0 : i32
    %c0_i32_0 = arith.constant 0 : i32
    %c0_i32_1 = arith.constant 0 : i32
    return %c0_i32, %c0_i32_0 : i32, i32
  }
  func.func @transform_4(%arg0: i32) -> (i32, i32) {
    %c0_i32 = arith.constant 0 : i32
    %c0_i32_0 = arith.constant 0 : i32
    %c0_i32_1 = arith.constant 0 : i32
    return %c0_i32, %c0_i32_0 : i32, i32
  }
  func.func @transform_5(%arg0: i32) -> (i32, i32) {
    %c0_i32 = arith.constant 0 : i32
    %c0_i32_0 = arith.constant 0 : i32
    %c0_i32_1 = arith.constant 0 : i32
    return %c0_i32, %c0_i32_0 : i32, i32
  }
  func.func @transform_6(%arg0: i32) -> (i32, i32) {
    %c0_i32 = arith.constant 0 : i32
    %c0_i32_0 = arith.constant 0 : i32
    %c0_i32_1 = arith.constant 0 : i32
    return %c0_i32, %c0_i32_0 : i32, i32
  }
  func.func @transform_7(%arg0: i32) -> (i32, i32, i32) {
    %c0_i32 = arith.constant 0 : i32
    %c0_i32_0 = arith.constant 0 : i32
    %c0_i32_1 = arith.constant 0 : i32
    return %arg0, %c0_i32, %c0_i32_0 : i32, i32, i32
  }
}

</mosaic_0001>

<llo_original>
// kernel: tpu_custom_call.1
$region0: #{tpu_custom_call.1}
  #allocation0 [shape = 'u32[]', space=smem, size = 0x4, offset = 0x4, fixed_abs, tag = 'smem constant byte address 0x4 - core index']
  #allocation1 [shape = 'u32[72,128]{1,0:T(1,128)}', space=vmem, size = 0x9000, scoped, tag = 'internal scratch']
  %s0 = inlined_call_operand.vmem [shape: f32[2,4,256], index: 0, kind: input, shape index: {}]
  %s1 = inlined_call_operand.vmem [shape: f32[2,4,64], index: 1, kind: input, shape index: {}]
  %s2 = inlined_call_operand.vmem [shape: bf16[8,4], index: 2, kind: input, shape index: {}]
  %s3 = inlined_call_operand.vmem [shape: f32[8,1], index: 3, kind: input, shape index: {}]
  %s4 = inlined_call_operand.vmem [shape: bf16[16,4], index: 4, kind: input, shape index: {}]
  %s5 = inlined_call_operand.vmem [shape: f32[16,1], index: 5, kind: input, shape index: {}]
  %s6 = inlined_call_operand.hbm [shape: f32[64,256], index: 6, kind: input, shape index: {}]
  %s7 = inlined_call_operand.hbm [shape: f32[2,8,256], index: 7, kind: output, shape index: {}]
  %s8 = sld [smem:[#allocation0]]
  $region42: #{tpu_custom_call.1} parent=0
    _
  %s10 = ssub.s32 1, %s8
  %s11 = scalar_select 0, %s10, %s8
  $region1: #{tpu_custom_call.1} parent=0
    #allocation2 [shape = 'u8[65536]{0}', space=vmem, size = 0x10000, scoped, tag = 'input window, operand 6, single buffered']
    #allocation3 [shape = 's32[1]{0}', space=sflag, size = 0x4, scoped, tag = 'scoped memory for tpu_custom_call.1']
    #allocation4 [shape = 's32[1]{0}', space=sflag, size = 0x4, scoped, tag = 'scoped memory for tpu_custom_call.1']
    #allocation5 [shape = 'u8[16384]{0}', space=vmem, size = 0x4000, scoped, tag = 'output window, operand 0, single buffered']
    %12 = vsyncpa [#allocation3], 0
    %13 = vsyncpa [#allocation4], 0
    // Predicated region
    $region2: #{tpu_custom_call.1} parent=1 // pred_check
      _
    $region3: #{tpu_custom_call.1} parent=1 // pred_check_branch
      %15 = sbr.rel (0) target = $region5
    $region4: #{tpu_custom_call.1} parent=1 // pred_region
      _
    $region5: #{tpu_custom_call.1} parent=1 // pred_fallthru
      _
    // Predicated region
    $region6: #{tpu_custom_call.1} parent=1 // pred_check
      _
    $region7: #{tpu_custom_call.1} parent=1 // pred_check_branch
      %17 = sbr.rel (0) target = $region9
    $region8: #{tpu_custom_call.1} parent=1 // pred_region
      _
    $region9: #{tpu_custom_call.1} parent=1 // pred_fallthru
      _
    // Predicated region
    $region10: #{tpu_custom_call.1} parent=1 // pred_check
      _
    $region11: #{tpu_custom_call.1} parent=1 // pred_check_branch
      %19 = sbr.rel (0) target = $region13
    $region12: #{tpu_custom_call.1} parent=1 // pred_region
      _
    $region13: #{tpu_custom_call.1} parent=1 // pred_fallthru
      _
    // Predicated region
    $region14: #{tpu_custom_call.1} parent=1 // pred_check
      _
    $region15: #{tpu_custom_call.1} parent=1 // pred_check_branch
      %21 = sbr.rel (0) target = $region17
    $region16: #{tpu_custom_call.1} parent=1 // pred_region
      _
    $region17: #{tpu_custom_call.1} parent=1 // pred_fallthru
      _
    // Predicated region
    $region18: #{tpu_custom_call.1} parent=1 // pred_check
      _
    $region19: #{tpu_custom_call.1} parent=1 // pred_check_branch
      %23 = sbr.rel (0) target = $region21
    $region20: #{tpu_custom_call.1} parent=1 // pred_region
      _
    $region21: #{tpu_custom_call.1} parent=1 // pred_fallthru
      _
    // Predicated region
    $region22: #{tpu_custom_call.1} parent=1 // pred_check
      _
    $region23: #{tpu_custom_call.1} parent=1 // pred_check_branch
      %25 = sbr.rel (0) target = $region25
    $region24: #{tpu_custom_call.1} parent=1 // pred_region
      _
    $region25: #{tpu_custom_call.1} parent=1 // pred_fallthru
      _
    // Predicated region
    $region26: #{tpu_custom_call.1} parent=1 // pred_check
      _
    $region27: #{tpu_custom_call.1} parent=1 // pred_check_branch
      %27 = sbr.rel (0) target = $region29
    $region28: #{tpu_custom_call.1} parent=1 // pred_region
      %29 = vsyncadd [#allocation3], 0
      %s30 = sshll.u32 %s6, 4
      %s31 = int_to_ptr.hbm [resolvable:$true] %s30
      %s32 = sshll.u32 [#allocation2], 4
      %s33 = int_to_ptr.vmem [resolvable:$true] %s32
      %38 = dma.hbm_to_vmem [thread:$0]  %s31, 2048, %s33, [#allocation3], 256, 256, 16
    $region29: #{tpu_custom_call.1} parent=1 // pred_fallthru
      _
    // Predicated region
    $region30: #{tpu_custom_call.1} parent=1 // pred_check
      _
    $region31: #{tpu_custom_call.1} parent=1 // pred_check_branch
      %40 = sbr.rel (0) target = $region33
    $region32: #{tpu_custom_call.1} parent=1 // pred_region
      %42 = dma.done [#allocation3], 2048
    $region33: #{tpu_custom_call.1} parent=1 // pred_fallthru
      _
    %v44 = vld [vmem:[%s2] sm:$0xf]
    %v45 = vld [vmem:[%s3] sm:$0xff]
    %v46 = vld [vmem:[%s4] sm:$0xf]
    %v47 = vld [vmem:[%s4 + $0x4] sm:$0xf]
    %v48 = vld [vmem:[%s5] sm:$0xff]
    %v49 = vld [vmem:[%s5 + $0x8] sm:$0xff]
    %v50 = vld [vmem:[#allocation2] sm:$0xff]
    %v51 = vld [vmem:[#allocation2 + $0x8] sm:$0xff]
    %v52 = vld [vmem:[#allocation2 + $0x10] sm:$0xff]
    %v53 = vld [vmem:[#allocation2 + $0x18] sm:$0xff]
    %v54 = vld [vmem:[#allocation2 + $0x20] sm:$0xff]
    %v55 = vld [vmem:[#allocation2 + $0x28] sm:$0xff]
    %v56 = vld [vmem:[#allocation2 + $0x30] sm:$0xff]
    %v57 = vld [vmem:[#allocation2 + $0x38] sm:$0xff]
    %v58 = vld [vmem:[#allocation2 + $0x40] sm:$0xff]
    %v59 = vld [vmem:[#allocation2 + $0x48] sm:$0xff]
    %v60 = vld [vmem:[#allocation2 + $0x50] sm:$0xff]
    %v61 = vld [vmem:[#allocation2 + $0x58] sm:$0xff]
    %v62 = vld [vmem:[#allocation2 + $0x60] sm:$0xff]
    %v63 = vld [vmem:[#allocation2 + $0x68] sm:$0xff]
    %v64 = vld [vmem:[#allocation2 + $0x70] sm:$0xff]
    %v65 = vld [vmem:[#allocation2 + $0x78] sm:$0xff]
    %v66 = vld [vmem:[%s0] sm:$0xff]
    %68 = vst [vmem:[#allocation1] ss:$2 sm:$0xff] %v66
    %v69 = vld.sshfl [vmem:[#allocation1] sm:$0xff pattern:$0x75316420]
    %v70 = vld.sshfl [vmem:[#allocation1 + $0x8] sm:$0xff pattern:$0x75316420]
    %v73 = vpack.c.bf16 %v69, %v69
    %v74 = vpack.c.bf16 %v70, %v70
    %v75 = vld [vmem:[%s1] sm:$0xf]
    %v76 = vpack.c.bf16 %v75, %v75
    %78 = vset.pattern.permute.xlu0 0
    %79 = vperm.xlu0 %78, %v45
    %v80 = vpop.permute.xlu0 %79
    %vm82 = vcmask 31744
    %v84 = vsel %vm82, %v44, 0
    %vm86 = vcmask 1041408
    %v88 = vsel %vm86, %v73, 0
    %v91 = vsel %vm86, %v74, 0
    %93 = vmatpush.bf16.msra.mxu0 0
    %94 = vmatpush.bf16.msra.mxu0 0
    %95 = vmatpush.bf16.msra.mxu0 0
    %96 = vmatpush.bf16.msra.mxu0 0
    %97 = vmatpush.bf16.msra.mxu0 0
    %98 = vmatpush.bf16.msra.mxu0 0
    %99 = vmatpush.bf16.msra.mxu0 0
    %100 = vmatpush.bf16.msra.mxu0 %v88
    %101 = vmatmul.bf16.gmra.mxu0 %v84
    %v102 = vpop.f32.mrf.mxu0
    %v103 = vadd.f32 %v80, %v102
    %v104 = vpop.f32.mrf.mxu0
    %105 = vdwg.mxu0
    %106 = vmatpush.bf16.msra.mxu0 0
    %107 = vmatpush.bf16.msra.mxu0 0
    %108 = vmatpush.bf16.msra.mxu0 0
    %109 = vmatpush.bf16.msra.mxu0 0
    %110 = vmatpush.bf16.msra.mxu0 0
    %111 = vmatpush.bf16.msra.mxu0 0
    %112 = vmatpush.bf16.msra.mxu0 0
    %113 = vmatpush.bf16.msra.mxu0 %v91
    %114 = vmatmul.bf16.gmra.mxu0 %v84
    %v115 = vpop.f32.mrf.mxu0
    %v116 = vadd.f32 %v80, %v115
    %v117 = vpop.f32.mrf.mxu0
    %118 = vdwg.mxu0
    %120 = vset.pattern.permute.xlu0 0
    %121 = vperm.xlu0 %120, %v48
    %v122 = vpop.permute.xlu0 %121
    %125 = vset.pattern.permute.xlu0 0
    %126 = vperm.xlu0 %125, %v49
    %v127 = vpop.permute.xlu0 %126
    %v131 = vunpack.c.l.b16 %v46
    %v132 = vunpack.c.l.b16 %v47
    %v133 = vpack.c.b16 %v132, %v131
    %v135 = vsel %vm82, %v133, 0
    %v138 = vsel %vm86, %v76, 0
    %140 = vmatpush.bf16.msra.mxu0 0
    %141 = vmatpush.bf16.msra.mxu0 0
    %142 = vmatpush.bf16.msra.mxu0 0
    %143 = vmatpush.bf16.msra.mxu0 0
    %144 = vmatpush.bf16.msra.mxu0 0
    %145 = vmatpush.bf16.msra.mxu0 0
    %146 = vmatpush.bf16.msra.mxu0 0
    %147 = vmatpush.bf16.msra.mxu0 %v138
    %148 = vmatmul.bf16.gmra.mxu0 %v135
    %v149 = vpop.f32.mrf.mxu0
    %v150 = vadd.f32 %v122, %v149
    %v151 = vpop.f32.mrf.mxu0
    %v152 = vadd.f32 %v127, %v151
    %153 = vdwg.mxu0
    %v154 = vmax.f32 %v152, 0.0
    %v155 = vmin.f32 %v154, 1.0
    %vm156 = vcmask 523264
    %v158 = vsel %vm156, %v150, 0
    %160 = vmatpush.msra.mxu0 0.0
    %161 = vmatpush.msra.mxu0 0.0
    %162 = vmatpush.msra.mxu0 0.0
    %163 = vmatpush.msra.mxu0 0.0
    %164 = vmatpush.msra.mxu0 0.0
    %165 = vmatpush.msra.mxu0 0.0
    %166 = vmatpush.msra.mxu0 0.0
    %167 = vmatpush.msra.mxu0 0.0
    %168 = vmatpush.msra.mxu0 %v64
    %169 = vmatpush.msra.mxu0 %v62
    %170 = vmatpush.msra.mxu0 %v60
    %171 = vmatpush.msra.mxu0 %v58
    %172 = vmatpush.msra.mxu0 %v56
    %173 = vmatpush.msra.mxu0 %v54
    %174 = vmatpush.msra.mxu0 %v52
    %175 = vmatpush.msra.mxu0 %v50
    %176 = vmatmul.f32.gmra.mxu0 %v158
    %v177 = vpop.f32.mrf.mxu0
    %v178 = vadd.f32 0.0, %v177
    %179 = vdwg.mxu0
    %180 = vmatpush.msra.mxu0 0.0
    %181 = vmatpush.msra.mxu0 0.0
    %182 = vmatpush.msra.mxu0 0.0
    %183 = vmatpush.msra.mxu0 0.0
    %184 = vmatpush.msra.mxu0 0.0
    %185 = vmatpush.msra.mxu0 0.0
    %186 = vmatpush.msra.mxu0 0.0
    %187 = vmatpush.msra.mxu0 0.0
    %188 = vmatpush.msra.mxu0 %v65
    %189 = vmatpush.msra.mxu0 %v63
    %190 = vmatpush.msra.mxu0 %v61
    %191 = vmatpush.msra.mxu0 %v59
    %192 = vmatpush.msra.mxu0 %v57
    %193 = vmatpush.msra.mxu0 %v55
    %194 = vmatpush.msra.mxu0 %v53
    %195 = vmatpush.msra.mxu0 %v51
    %196 = vmatmul.f32.gmra.mxu0 %v158
    %v197 = vpop.f32.mrf.mxu0
    %v198 = vadd.f32 0.0, %v197
    %199 = vdwg.mxu0
    %v201 = vsel %vm156, %v155, 0
    %203 = vmatpush.msra.mxu0 0.0
    %204 = vmatpush.msra.mxu0 0.0
    %205 = vmatpush.msra.mxu0 0.0
    %206 = vmatpush.msra.mxu0 0.0
    %207 = vmatpush.msra.mxu0 0.0
    %208 = vmatpush.msra.mxu0 0.0
    %209 = vmatpush.msra.mxu0 0.0
    %210 = vmatpush.msra.mxu0 0.0
    %211 = vmatpush.msra.mxu0 %v64
    %212 = vmatpush.msra.mxu0 %v62
    %213 = vmatpush.msra.mxu0 %v60
    %214 = vmatpush.msra.mxu0 %v58
    %215 = vmatpush.msra.mxu0 %v56
    %216 = vmatpush.msra.mxu0 %v54
    %217 = vmatpush.msra.mxu0 %v52
    %218 = vmatpush.msra.mxu0 %v50
    %219 = vmatmul.f32.gmra.mxu0 %v201
    %v220 = vpop.f32.mrf.mxu0
    %v221 = vadd.f32 0.0, %v220
    %222 = vdwg.mxu0
    %223 = vmatpush.msra.mxu0 0.0
    %224 = vmatpush.msra.mxu0 0.0
    %225 = vmatpush.msra.mxu0 0.0
    %226 = vmatpush.msra.mxu0 0.0
    %227 = vmatpush.msra.mxu0 0.0
    %228 = vmatpush.msra.mxu0 0.0
    %229 = vmatpush.msra.mxu0 0.0
    %230 = vmatpush.msra.mxu0 0.0
    %231 = vmatpush.msra.mxu0 %v65
    %232 = vmatpush.msra.mxu0 %v63
    %233 = vmatpush.msra.mxu0 %v61
    %234 = vmatpush.msra.mxu0 %v59
    %235 = vmatpush.msra.mxu0 %v57
    %236 = vmatpush.msra.mxu0 %v55
    %237 = vmatpush.msra.mxu0 %v53
    %238 = vmatpush.msra.mxu0 %v51
    %239 = vmatmul.f32.gmra.mxu0 %v201
    %v240 = vpop.f32.mrf.mxu0
    %v241 = vadd.f32 0.0, %v240
    %242 = vdwg.mxu0
    %v243 = vmul.f32 %v103, %v221
    %v244 = vmul.f32 %v116, %v241
    %v245 = vadd.f32 %v243, %v178
    %v246 = vadd.f32 %v244, %v198
    %247 = vst [vmem:[#allocation5] sm:$0xff] %v245
    %248 = vst [vmem:[#allocation5 + $0x8] sm:$0xff] %v246
    %s249 = scalar_lea.vmem %s0, 8
    %v250 = vld [vmem:[%s249] sm:$0xff]
    %252 = vst [vmem:[#allocation1] ss:$2 sm:$0xff] %v250
    %v253 = vld.sshfl [vmem:[#allocation1] sm:$0xff pattern:$0x75316420]
    %v254 = vld.sshfl [vmem:[#allocation1 + $0x8] sm:$0xff pattern:$0x75316420]
    %v257 = vpack.c.bf16 %v253, %v253
    %v258 = vpack.c.bf16 %v254, %v254
    %s259 = scalar_lea.vmem %s1, 4
    %v260 = vld [vmem:[%s259] sm:$0xf]
    %v261 = vpack.c.bf16 %v260, %v260
    %v263 = vsel %vm86, %v257, 0
    %v266 = vsel %vm86, %v258, 0
    %268 = vmatpush.bf16.msra.mxu0 0
    %269 = vmatpush.bf16.msra.mxu0 0
    %270 = vmatpush.bf16.msra.mxu0 0
    %271 = vmatpush.bf16.msra.mxu0 0
    %272 = vmatpush.bf16.msra.mxu0 0
    %273 = vmatpush.bf16.msra.mxu0 0
    %274 = vmatpush.bf16.msra.mxu0 0
    %275 = vmatpush.bf16.msra.mxu0 %v263
    %276 = vmatmul.bf16.gmra.mxu0 %v84
    %v277 = vpop.f32.mrf.mxu0
    %v278 = vadd.f32 %v80, %v277
    %v279 = vpop.f32.mrf.mxu0
    %280 = vdwg.mxu0
    %281 = vmatpush.bf16.msra.mxu0 0
    %282 = vmatpush.bf16.msra.mxu0 0
    %283 = vmatpush.bf16.msra.mxu0 0
    %284 = vmatpush.bf16.msra.mxu0 0
    %285 = vmatpush.bf16.msra.mxu0 0
    %286 = vmatpush.bf16.msra.mxu0 0
    %287 = vmatpush.bf16.msra.mxu0 0
    %288 = vmatpush.bf16.msra.mxu0 %v266
    %289 = vmatmul.bf16.gmra.mxu0 %v84
    %v290 = vpop.f32.mrf.mxu0
    %v291 = vadd.f32 %v80, %v290
    %v292 = vpop.f32.mrf.mxu0
    %293 = vdwg.mxu0
    %v295 = vsel %vm86, %v261, 0
    %297 = vmatpush.bf16.msra.mxu0 0
    %298 = vmatpush.bf16.msra.mxu0 0
    %299 = vmatpush.bf16.msra.mxu0 0
    %300 = vmatpush.bf16.msra.mxu0 0
    %301 = vmatpush.bf16.msra.mxu0 0
    %302 = vmatpush.bf16.msra.mxu0 0
    %303 = vmatpush.bf16.msra.mxu0 0
    %304 = vmatpush.bf16.msra.mxu0 %v295
    %305 = vmatmul.bf16.gmra.mxu0 %v135
    %v306 = vpop.f32.mrf.mxu0
    %v307 = vadd.f32 %v122, %v306
    %v308 = vpop.f32.mrf.mxu0
    %v309 = vadd.f32 %v127, %v308
    %310 = vdwg.mxu0
    %v311 = vmax.f32 %v309, 0.0
    %v312 = vmin.f32 %v311, 1.0
    %v314 = vsel %vm156, %v307, 0
    %316 = vmatpush.msra.mxu0 0.0
    %317 = vmatpush.msra.mxu0 0.0
    %318 = vmatpush.msra.mxu0 0.0
    %319 = vmatpush.msra.mxu0 0.0
    %320 = vmatpush.msra.mxu0 0.0
    %321 = vmatpush.msra.mxu0 0.0
    %322 = vmatpush.msra.mxu0 0.0
    %323 = vmatpush.msra.mxu0 0.0
    %324 = vmatpush.msra.mxu0 %v64
    %325 = vmatpush.msra.mxu0 %v62
    %326 = vmatpush.msra.mxu0 %v60
    %327 = vmatpush.msra.mxu0 %v58
    %328 = vmatpush.msra.mxu0 %v56
    %329 = vmatpush.msra.mxu0 %v54
    %330 = vmatpush.msra.mxu0 %v52
    %331 = vmatpush.msra.mxu0 %v50
    %332 = vmatmul.f32.gmra.mxu0 %v314
    %v333 = vpop.f32.mrf.mxu0
    %v334 = vadd.f32 0.0, %v333
    %335 = vdwg.mxu0
    %336 = vmatpush.msra.mxu0 0.0
    %337 = vmatpush.msra.mxu0 0.0
    %338 = vmatpush.msra.mxu0 0.0
    %339 = vmatpush.msra.mxu0 0.0
    %340 = vmatpush.msra.mxu0 0.0
    %341 = vmatpush.msra.mxu0 0.0
    %342 = vmatpush.msra.mxu0 0.0
    %343 = vmatpush.msra.mxu0 0.0
    %344 = vmatpush.msra.mxu0 %v65
    %345 = vmatpush.msra.mxu0 %v63
    %346 = vmatpush.msra.mxu0 %v61
    %347 = vmatpush.msra.mxu0 %v59
    %348 = vmatpush.msra.mxu0 %v57
    %349 = vmatpush.msra.mxu0 %v55
    %350 = vmatpush.msra.mxu0 %v53
    %351 = vmatpush.msra.mxu0 %v51
    %352 = vmatmul.f32.gmra.mxu0 %v314
    %v353 = vpop.f32.mrf.mxu0
    %v354 = vadd.f32 0.0, %v353
    %355 = vdwg.mxu0
    %v357 = vsel %vm156, %v312, 0
    %359 = vmatpush.msra.mxu0 0.0
    %360 = vmatpush.msra.mxu0 0.0
    %361 = vmatpush.msra.mxu0 0.0
    %362 = vmatpush.msra.mxu0 0.0
    %363 = vmatpush.msra.mxu0 0.0
    %364 = vmatpush.msra.mxu0 0.0
    %365 = vmatpush.msra.mxu0 0.0
    %366 = vmatpush.msra.mxu0 0.0
    %367 = vmatpush.msra.mxu0 %v64
    %368 = vmatpush.msra.mxu0 %v62
    %369 = vmatpush.msra.mxu0 %v60
    %370 = vmatpush.msra.mxu0 %v58
    %371 = vmatpush.msra.mxu0 %v56
    %372 = vmatpush.msra.mxu0 %v54
    %373 = vmatpush.msra.mxu0 %v52
    %374 = vmatpush.msra.mxu0 %v50
    %375 = vmatmul.f32.gmra.mxu0 %v357
    %v376 = vpop.f32.mrf.mxu0
    %v377 = vadd.f32 0.0, %v376
    %378 = vdwg.mxu0
    %379 = vmatpush.msra.mxu0 0.0
    %380 = vmatpush.msra.mxu0 0.0
    %381 = vmatpush.msra.mxu0 0.0
    %382 = vmatpush.msra.mxu0 0.0
    %383 = vmatpush.msra.mxu0 0.0
    %384 = vmatpush.msra.mxu0 0.0
    %385 = vmatpush.msra.mxu0 0.0
    %386 = vmatpush.msra.mxu0 0.0
    %387 = vmatpush.msra.mxu0 %v65
    %388 = vmatpush.msra.mxu0 %v63
    %389 = vmatpush.msra.mxu0 %v61
    %390 = vmatpush.msra.mxu0 %v59
    %391 = vmatpush.msra.mxu0 %v57
    %392 = vmatpush.msra.mxu0 %v55
    %393 = vmatpush.msra.mxu0 %v53
    %394 = vmatpush.msra.mxu0 %v51
    %395 = vmatmul.f32.gmra.mxu0 %v357
    %v396 = vpop.f32.mrf.mxu0
    %v397 = vadd.f32 0.0, %v396
    %398 = vdwg.mxu0
    %v399 = vmul.f32 %v278, %v377
    %v400 = vmul.f32 %v291, %v397
    %v401 = vadd.f32 %v399, %v334
    %v402 = vadd.f32 %v400, %v354
    %s403 = scalar_lea.vmem [#allocation5], 16
    %404 = vst [vmem:[%s403] sm:$0xff] %v401
    %405 = vst [vmem:[%s403 + $0x8] sm:$0xff] %v402
    // Predicated region
    $region34: #{tpu_custom_call.1} parent=1 // pred_check
      _
    $region35: #{tpu_custom_call.1} parent=1 // pred_check_branch
      %407 = sbr.rel (0) target = $region37
    $region36: #{tpu_custom_call.1} parent=1 // pred_region
      %409 = vsyncadd [#allocation4], 0
      %s410 = sshll.u32 [#allocation5], 4
      %s411 = int_to_ptr.vmem [resolvable:$true] %s410
      %s412 = sshll.u32 %s7, 4
      %s413 = int_to_ptr.hbm [resolvable:$true] %s412
      %418 = dma.vmem_to_hbm [thread:$0]  %s411, 512, %s413, [#allocation4], 256, 256, 16
    $region37: #{tpu_custom_call.1} parent=1 // pred_fallthru
      _
    // Predicated region
    $region38: #{tpu_custom_call.1} parent=1 // pred_check
      _
    $region39: #{tpu_custom_call.1} parent=1 // pred_check_branch
      %420 = sbr.rel (0) target = $region41
    $region40: #{tpu_custom_call.1} parent=1 // pred_region
      %422 = dma.done [#allocation4], 512
    $region41: #{tpu_custom_call.1} parent=1 // pred_fallthru
      _
    %423 = vsyncpa [#allocation3], 1
    %424 = vsyncpa [#allocation4], 1

</llo_original>
